<compile_context>
chip_gen: v7x
topology: tpu7x:2x2x1
jax: 0.10.0
libtpu: 0.0.40
codegen_flags: <defaults>
</compile_context>

<pallas_src>
import functools

import jax
import jax.numpy as jnp
from jax.experimental import pallas as pl
from jax.experimental.pallas import tpu as pltpu

LANES = 128            # vreg lane width (minor dim)
MAX_BLOCK_ROWS = 4096  # 4096 x 128 x 4B = 2 MiB per f32 block (x2 double-buffer)


def _cdiv(a, b):
    return -(-a // b)


def _round_up(a, b):
    return _cdiv(a, b) * b


def _num_parallel_cores():
    """2 on megacore parts (v4 / v5p / v7x), else 1 (v5e / v6e)."""
    try:
        kind = jax.devices()[0].device_kind.lower().replace(" ", "")
    except Exception:  # non-TPU / exotic backends
        return 1
    return 2 if any(tag in kind for tag in ("v4", "v5p", "7")) else 1


def _nowcasting_loss_kernel(x_ref, o_ref, *, negate, rows_total, mask_last):
    """Grid (split, blocks_per_split): accumulate sum(relu(1 +/- x)) per split."""
    p = pl.program_id(0)            # parallel axis (megacore split)
    i = pl.program_id(1)            # reduction axis (streamed blocks)

    @pl.when(i == 0)
    def _init():
        o_ref[...] = jnp.zeros_like(o_ref)

    xt = x_ref[...].astype(jnp.float32)       # upcast in-register (VPU slack)
    rows, lanes = xt.shape                    # static block shape
    # real: relu(1 - x); fake: relu(1 + x)    (2 VALU ops per vreg)
    hinge = jnp.maximum(1.0 - xt, 0.0) if negate else jnp.maximum(1.0 + xt, 0.0)

    def _accum(h):
        if rows % 8 == 0:
            # Lane/sublane-dense accumulation straight into the grid-resident
            # output block: one extra VALU add per vreg, no per-step XLU.
            o_ref[...] += h.reshape(-1, 8, lanes).sum(axis=0).reshape(o_ref.shape)
        else:
            # Tiny single full-array block (< multiple-of-8 rows): one-off
            # sublane reduce into the first accumulator row; perf irrelevant.
            o_ref[0:1, 0:1, :] += h.sum(axis=0, keepdims=True).reshape(1, 1, lanes)

    if mask_last:
        n_inner = pl.num_programs(1)
        blk = p * n_inner + i                           # global block index
        is_last = blk == pl.num_programs(0) * n_inner - 1

        @pl.when(is_last)
        def _ragged_tail():
            # Only the final ragged block pays iota/compare/select.
            valid_rows = rows_total - blk * rows
            row_ids = jax.lax.broadcasted_iota(jnp.int32, (rows, lanes), 0)
            _accum(jnp.where(row_ids < valid_rows, hinge, 0.0))

        @pl.when(jnp.logical_not(is_last))
        def _dense_body():
            _accum(hinge)
    else:
        _accum(hinge)


def _nowcasting_loss_impl(x, real_flag, block_rows, split):
    n = 1
    for d in x.shape:
        n *= int(d)
    flat = x.reshape(-1)                      # zero-copy flatten, native dtype

    # Fold the < 128-element lane tail in with plain jnp (tiny), so the kernel
    # only ever sees lane-complete rows and never needs a padded copy of x.
    n_main = (n // LANES) * LANES
    tail_sum = None
    if n_main < n:
        t = flat[n_main:].astype(jnp.float32)
        t = -t if real_flag else t
        tail_sum = jnp.sum(jnp.maximum(1.0 + t, 0.0))
    if n_main == 0:                           # everything fit in the tail
        return tail_sum / n

    rows_total = n_main // LANES
    # Note: for 128-aligned n this reshape is zero-copy; for ragged n the
    # prefix slice may materialize, which is still no worse than padding.
    x2d = (flat if n_main == n else flat[:n_main]).reshape(rows_total, LANES)

    if block_rows is None:
        block_rows = MAX_BLOCK_ROWS
    block_rows = max(8, _round_up(int(block_rows), 8))
    if rows_total <= block_rows:
        block_rows = rows_total               # single full-array block
    n_blocks = _cdiv(rows_total, block_rows)

    if split is None:
        if _num_parallel_cores() >= 2 and n_blocks > 1:
            if n_blocks % 2:
                # Nudge block size down so both TensorCores get equal block
                # counts (no clamped duplicate block, no wasted DMA).
                nudged = _round_up(_cdiv(rows_total, n_blocks + 1), 8)
                if _cdiv(rows_total, nudged) % 2 == 0:
                    block_rows = nudged
                    n_blocks = _cdiv(rows_total, block_rows)
            split = 2 if n_blocks % 2 == 0 else 1
        else:
            split = 1
    if split < 1 or n_blocks % split != 0:
        split = 1
    bps = n_blocks // split                   # blocks per split
    mask_last = (rows_total % block_rows) != 0

    kernel = functools.partial(
        _nowcasting_loss_kernel,
        negate=bool(real_flag),
        rows_total=rows_total,
        mask_last=mask_last,
    )

    partials = pl.pallas_call(
        kernel,
        out_shape=jax.ShapeDtypeStruct((split, 8, LANES), jnp.float32),
        grid=(split, bps),
        in_specs=[pl.BlockSpec((block_rows, LANES),
                               lambda p, i: (p * bps + i, 0))],
        out_specs=pl.BlockSpec((1, 8, LANES), lambda p, i: (p, 0, 0)),
        compiler_params=pltpu.CompilerParams(
            dimension_semantics=("parallel", "arbitrary")),
    )(x2d)

    # One cheap cross-lane reduce of the per-split partials + mean scaling.
    total = jnp.sum(partials)
    if tail_sum is not None:
        total = total + tail_sum
    return total / n


_nowcasting_loss_jit = jax.jit(_nowcasting_loss_impl, static_argnums=(1, 2, 3))


def nowcasting_loss(x, real_flag, *, block_rows=None, split=None):
    """Pallas implementation of NowcastingLoss.forward(x, real_flag)."""
    if x.size == 0:
        return jnp.float32(jnp.nan)           # mirrors torch mean of empty
    return _nowcasting_loss_jit(x, bool(real_flag), block_rows, split)


if __name__ == "__main__":
    key = jax.random.PRNGKey(0)
    ks = jax.random.split(key, 6)

    def ref(x, real_flag):
        xx = -x if real_flag else x
        return jnp.mean(jnp.maximum(1.0 + xx.astype(jnp.float32), 0.0))

    cases = [
        # (input, kwargs)
        (jax.random.normal(ks[0], (2, 4, 16, 16), dtype=jnp.float32), {}),
        # non-128-multiple size: lane tail in wrapper + rows<8 kernel path
        (jax.random.normal(ks[1], (2, 3, 5, 7), dtype=jnp.float32), {}),
        # multi-block, even 2-way split, unmasked path
        (jax.random.normal(ks[2], (4, 4, 64, 128), dtype=jnp.float32),
         dict(block_rows=64, split=2)),
        # multi-block, 2-way split, ragged (row-masked) final block
        (jax.random.normal(ks[3], (1, 1000, 128), dtype=jnp.float32),
         dict(block_rows=64, split=2)),
        # bf16 input (in-register upcast path)
        (jax.random.normal(ks[4], (2, 4, 16, 16), dtype=jnp.bfloat16), {}),
        # auto block/split selection with a ragged final block
        (jax.random.normal(ks[5], (2, 4, 768, 128), dtype=jnp.float32), {}),
    ]

    results = []
    for x, kw in cases:
        for flag in (False, True):
            got = nowcasting_loss(x, flag, **kw)
            want = ref(x, flag)
            jax.block_until_ready((got, want))
            assert jnp.allclose(got, want, atol=1e-5, rtol=1e-4), (
                x.shape, x.dtype, flag, kw, got, want)
            results.append(got)

    jax.block_until_ready(results)
    print("KERNEL_OK")
</pallas_src>

<mosaic_0001>
module attributes {stable_mosaic.version = 11 : i64} {
  func.func @_nowcasting_loss_kernel(%arg0: i32, %arg1: i32, %arg2: memref<16x128xf32, #tpu.memory_space<vmem>>, %arg3: memref<1x8x128xf32, #tpu.memory_space<vmem>>) attributes {dimension_semantics = [#tpu.dimension_semantics<parallel>, #tpu.dimension_semantics<arbitrary>], iteration_bounds = array<i64: 1, 1>, scalar_prefetch = 0 : i64, scratch_operands = 0 : i64, tpu.core_type = #tpu.core_type<tc>, window_params = [{transform_indices = @transform_0, window_bounds = array<i64: 16, 128>}, {transform_indices = @transform_1, window_bounds = array<i64: 1, 8, 128>}]} {
    %c0_i32 = arith.constant 0 : i32
    %0 = arith.cmpi eq, %arg1, %c0_i32 : i32
    %1 = arith.extui %0 : i1 to i32
    %c0_i32_0 = arith.constant 0 : i32
    %2 = arith.cmpi ne, %1, %c0_i32_0 : i32
    scf.if %2 {
      %cst_10 = arith.constant 0.000000e+00 : f32
      %14 = vector.broadcast %cst_10 : f32 to vector<1x8x128xf32>
      %c0_11 = arith.constant 0 : index
      %c0_12 = arith.constant 0 : index
      %c0_13 = arith.constant 0 : index
      %15 = vector.load %arg3[%c0_11, %c0_12, %c0_13] : memref<1x8x128xf32, #tpu.memory_space<vmem>>, vector<1x8x128xf32>
      tpu.vector_store %arg3[%c0_11, %c0_12, %c0_13], %14 {strides = array<i32>} : memref<1x8x128xf32, #tpu.memory_space<vmem>>, vector<1x8x128xf32>,
    } else {
    }
    %c0 = arith.constant 0 : index
    %c0_1 = arith.constant 0 : index
    %3 = vector.load %arg2[%c0, %c0_1] : memref<16x128xf32, #tpu.memory_space<vmem>>, vector<16x128xf32>
    %cst = arith.constant 1.000000e+00 : f32
    %4 = vector.broadcast %cst : f32 to vector<16x128xf32>
    %5 = arith.addf %4, %3 : vector<16x128xf32>
    %cst_2 = arith.constant 0.000000e+00 : f32
    %6 = vector.broadcast %cst_2 : f32 to vector<16x128xf32>
    %7 = arith.maximumf %5, %6 : vector<16x128xf32>
    %c0_3 = arith.constant 0 : index
    %c0_4 = arith.constant 0 : index
    %c0_5 = arith.constant 0 : index
    %8 = vector.load %arg3[%c0_3, %c0_4, %c0_5] : memref<1x8x128xf32, #tpu.memory_space<vmem>>, vector<1x8x128xf32>
    %9 = vector.shape_cast %7 : vector<16x128xf32> to vector<2x8x128xf32>
    %cst_6 = arith.constant dense<0.000000e+00> : vector<8x128xf32>
    %10 = vector.multi_reduction <add>, %9, %cst_6 [0] : vector<2x8x128xf32> to vector<8x128xf32>
    %11 = vector.shape_cast %10 : vector<8x128xf32> to vector<1x8x128xf32>
    %12 = arith.addf %8, %11 : vector<1x8x128xf32>
    %c0_7 = arith.constant 0 : index
    %c0_8 = arith.constant 0 : index
    %c0_9 = arith.constant 0 : index
    %13 = vector.load %arg3[%c0_7, %c0_8, %c0_9] : memref<1x8x128xf32, #tpu.memory_space<vmem>>, vector<1x8x128xf32>
    tpu.vector_store %arg3[%c0_7, %c0_8, %c0_9], %12 {strides = array<i32>} : memref<1x8x128xf32, #tpu.memory_space<vmem>>, vector<1x8x128xf32>,
    return
  }
  func.func @transform_0(%arg0: i32, %arg1: i32) -> (i32, i32) {
    %c1_i32 = arith.constant 1 : i32
    %0 = arith.muli %arg0, %c1_i32 : i32
    %1 = arith.addi %0, %arg1 : i32
    %c0_i32 = arith.constant 0 : i32
    %c0_i32_0 = arith.constant 0 : i32
    return %1, %c0_i32 : i32, i32
  }
  func.func @transform_1(%arg0: i32, %arg1: i32) -> (i32, i32, i32) {
    %c0_i32 = arith.constant 0 : i32
    %c0_i32_0 = arith.constant 0 : i32
    %c0_i32_1 = arith.constant 0 : i32
    return %arg0, %c0_i32, %c0_i32_0 : i32, i32, i32
  }
}

</mosaic_0001>

<llo_original>
// kernel: _nowcasting_loss_impl.1
$region0: #{_nowcasting_loss_impl.1}
  #allocation0 [shape = 'u32[]', space=smem, size = 0x4, offset = 0x4, fixed_abs, tag = 'smem constant byte address 0x4 - core index']
  #allocation1 [shape = 'u32[144,128]{1,0:T(1,128)}', space=vmem, size = 0x12000, scoped, tag = 'internal scratch']
  %s0 = inlined_call_operand.vmem [shape: f32[16,128], index: 0, kind: input, shape index: {}]
  %s1 = inlined_call_operand.vmem [shape: f32[1,8,128], index: 1, kind: output, shape index: {}]
  %s2 = sld [smem:[#allocation0]]
  $region18: #{_nowcasting_loss_impl.1} parent=0
    _
  %s4 = ssub.s32 1, %s2
  %s5 = scalar_select 0, %s4, %s2
  // Predicated region
  $region2: #{_nowcasting_loss_impl.1} parent=0 // pred_check
    _
  $region3: #{_nowcasting_loss_impl.1} parent=0 // pred_check_branch
    %7 = sbr.rel (0) target = $region5
  $region4: #{_nowcasting_loss_impl.1} parent=0 // pred_region
    %s8 = sadd.s32 0, 0
    %s9 = smul.u32 2, %s8
    %p10 = scmp.lt.s32.totalorder %s9, 1
    %s11 = scalar_select %p10, %s9, 1
    %s12 = smul.addr %s11, 8
    %s13 = scalar_lea.vmem %s0, %s12
    %s14 = sadd.s32 0, 0
    %s15 = smul.u32 2, %s14
  $region5: #{_nowcasting_loss_impl.1} parent=0 // pred_fallthru
    _
  %s16 = sadd.s32 0, 0
  %s17 = smul.u32 2, %s16
  %p18 = scmp.lt.s32.totalorder %s17, 1
  %s19 = scalar_select %p18, %s17, 1
  %s20 = smul.addr %s19, 8
  %s21 = scalar_lea.vmem %s0, %s20
  %s22 = sadd.s32 0, 0
  %s23 = smul.u32 2, %s22
  %p24 = scmp.lt.s32.totalorder %s23, 1
  %s25 = scalar_select %p24, %s23, 1
  %s26 = smul.addr %s25, 8
  %s27 = scalar_lea.vmem %s0, %s26
  %s28 = sadd.s32 0, 0
  %s29 = smul.u32 2, %s28
  %p30 = scmp.eq.s32.totalorder 0, 0
  // Predicated region
  $region6: #{_nowcasting_loss_impl.1} parent=0 // pred_check
    %p31 = pneg %p30
  $region7: #{_nowcasting_loss_impl.1} parent=0 // pred_check_branch
    %33 = sbr.rel (%p31) target = $region9
  $region8: #{_nowcasting_loss_impl.1} parent=0 // pred_region
    %34 = vst [vmem:[%s1] sm:$0xff] 0.0
  $region9: #{_nowcasting_loss_impl.1} parent=0 // pred_fallthru
    _
  %v35 = vld [vmem:[%s27] sm:$0xff]
  %v36 = vld [vmem:[%s27 + $0x8] sm:$0xff]
  %v37 = vadd.f32 %v35, 1.0
  %v38 = vadd.f32 %v36, 1.0
  %v39 = vmax.f32 %v37, 0.0
  %v40 = vmax.f32 %v38, 0.0
  %v41 = vld [vmem:[%s1] sm:$0xff]
  %v42 = vadd.f32 %v39, %v40
  %v43 = vadd.f32 %v41, %v42
  %44 = vst [vmem:[%s1] sm:$0xff] %v43
  // Predicated region
  $region10: #{_nowcasting_loss_impl.1} parent=0 // pred_check
    _
  $region11: #{_nowcasting_loss_impl.1} parent=0 // pred_check_branch
    %46 = sbr.rel (0) target = $region13
  $region12: #{_nowcasting_loss_impl.1} parent=0 // pred_region
    _
  $region13: #{_nowcasting_loss_impl.1} parent=0 // pred_fallthru
    _
  // Predicated region
  $region14: #{_nowcasting_loss_impl.1} parent=0 // pred_check
    _
  $region15: #{_nowcasting_loss_impl.1} parent=0 // pred_check_branch
    %48 = sbr.rel (0) target = $region17
  $region16: #{_nowcasting_loss_impl.1} parent=0 // pred_region
    _
  $region17: #{_nowcasting_loss_impl.1} parent=0 // pred_fallthru
    _

</llo_original>
